<compile_context>
chip_gen: v6e
topology: v6e:2x2x1
jax: 0.10.0
libtpu: 0.0.40
codegen_flags: <defaults>
</compile_context>

<pallas_src>
import math

import jax
import jax.numpy as jnp
from jax import lax
from jax.experimental import pallas as pl
from jax.experimental.pallas import tpu as pltpu


_LANE = 128  # vreg lane width: keep last dims lane-dense
_INV_SQRT2 = 1.0 / math.sqrt(2.0)


def _round_up(x, m):
    return ((x + m - 1) // m) * m


def _gelu_erf(h):
    # erf-based gelu (matches the PyTorch module); kept in f32 (v5e-safe EUP path).
    return h * 0.5 * (1.0 + lax.erf(h * jnp.float32(_INV_SQRT2)))


def _layer_norm_epilogue(z, g_ref, beta_ref, eps, h_real, h_pad, out_dtype):
    """Residual-summed f32 tile -> LayerNorm(gamma, beta) in out_dtype."""
    inv_h = jnp.float32(1.0 / h_real)
    mean = jnp.sum(z, axis=-1, keepdims=True) * inv_h
    cent = z - mean
    if h_pad != h_real:
        # ignore zero-padded hidden columns in the variance
        col = lax.broadcasted_iota(jnp.int32, z.shape, 1)
        cent_m = jnp.where(col < h_real, cent, 0.0)
    else:
        cent_m = cent
    var = jnp.sum(cent_m * cent_m, axis=-1, keepdims=True) * inv_h
    normed = cent * lax.rsqrt(var + jnp.float32(eps))
    return (normed * g_ref[...].astype(jnp.float32)
            + beta_ref[...].astype(jnp.float32)).astype(out_dtype)


def _make_ffn_kernel_single(eps: float, h_real: int, h_pad: int):
    """Whole I dim in one tile: no accumulator scratch, 1-D parallel grid."""

    def ffn_kernel(x_ref, w1_ref, b1_ref, w2_ref, b2_ref, g_ref, beta_ref, o_ref):
        x = x_ref[...]
        h = jnp.dot(x, w1_ref[...], preferred_element_type=jnp.float32)
        h = h + b1_ref[...].astype(jnp.float32)
        h = _gelu_erf(h)
        y = jnp.dot(h.astype(w2_ref.dtype), w2_ref[...],
                    preferred_element_type=jnp.float32)
        # dropout: eval mode -> identity
        # TODO(synk): training-mode dropout (pltpu.prng_*) not implemented.
        z = y + b2_ref[...].astype(jnp.float32) + x.astype(jnp.float32)
        o_ref[...] = _layer_norm_epilogue(z, g_ref, beta_ref, eps, h_real, h_pad,
                                          o_ref.dtype)

    return ffn_kernel


def _make_ffn_kernel_acc(eps: float, h_real: int, h_pad: int):
    """FFN + residual + LayerNorm; the I reduction rides the last grid axis."""

    def ffn_kernel(x_ref, w1_ref, b1_ref, w2_ref, b2_ref, g_ref, beta_ref,
                   o_ref, acc_ref):
        ti = pl.program_id(1)

        @pl.when(ti == 0)
        def _():
            acc_ref[...] = jnp.zeros_like(acc_ref)

        # dense_1 on this I-slice: native-dtype operands, f32 accumulation.
        x = x_ref[...]
        h = jnp.dot(x, w1_ref[...], preferred_element_type=jnp.float32)
        h = h + b1_ref[...].astype(jnp.float32)
        h = _gelu_erf(h)
        # dense_2 partial product accumulated in the f32 VMEM scratch.
        acc_ref[...] += jnp.dot(h.astype(w2_ref.dtype), w2_ref[...],
                                preferred_element_type=jnp.float32)

        @pl.when(ti == pl.num_programs(1) - 1)
        def _():
            # dropout: eval mode -> identity
            # TODO(synk): training-mode dropout (pltpu.prng_*) not implemented.
            z = (acc_ref[...]
                 + b2_ref[...].astype(jnp.float32)
                 + x_ref[...].astype(jnp.float32))          # residual, f32
            o_ref[...] = _layer_norm_epilogue(z, g_ref, beta_ref, eps, h_real,
                                              h_pad, o_ref.dtype)

    return ffn_kernel


def _maybe_pad(a, pads):
    if all(p == (0, 0) for p in pads):
        return a
    return jnp.pad(a, pads)


def feed_forward(x, w1, b1, w2, b2, gamma, beta, *, eps=1e-12,
                 vmem_budget_bytes=20 << 20):
    """x: (B, S, H); w1: (H, I); b1: (I,); w2: (I, H); b2/gamma/beta: (H,)."""
    B, S, H = x.shape
    I = w1.shape[1]
    assert w1.shape == (H, I) and w2.shape == (I, H)

    H_pad = _round_up(H, _LANE)
    I_pad = _round_up(I, _LANE)
    M = B * S  # point-wise over hidden dim -> flatten (B, S) into rows

    x_items = jnp.dtype(x.dtype).itemsize
    w_items = jnp.dtype(w1.dtype).itemsize
    sub = 16 if x_items == 2 else 8  # sublane granularity (bf16 packs 16)

    # ---- tile selection (VMEM-budgeted, dtype-aware) -----------------------
    ti = min(I_pad, 512)                       # lane-dense I tile
    while I_pad % ti:
        ti -= _LANE
    n_ti = I_pad // ti
    single = n_ti == 1

    # per-row VMEM bytes: x + out double-buffered, f32 acc (multi-step only),
    # f32 h tile (+ cast copy).
    per_row = (H_pad * (2 * x_items + 2 * x_items + (0 if single else 4))
               + ti * (4 + w_items))
    weight_bytes = (2 * (H_pad * ti + ti * H_pad) * w_items
                    + 2 * ti * 4 + 3 * H_pad * 4)
    tm_budget = max(sub, (vmem_budget_bytes - weight_bytes) // per_row)
    tm_budget = max(sub, min(2048, (tm_budget // sub) * sub))
    # ensure >= 2 grid steps along rows when possible (megacore + pipelining)
    tm_two = _round_up(pl.cdiv(M, 2), sub)
    tm = max(sub, min(tm_budget, tm_two))
    M_pad = _round_up(M, tm)
    n_rows = M_pad // tm

    # ---- pad operands to lane-dense shapes (zero padding is exact) ---------
    x2 = _maybe_pad(x.reshape(M, H), ((0, M_pad - M), (0, H_pad - H)))
    w1p = _maybe_pad(w1, ((0, H_pad - H), (0, I_pad - I)))
    b1p = _maybe_pad(b1.reshape(1, I), ((0, 0), (0, I_pad - I)))
    w2p = _maybe_pad(w2, ((0, I_pad - I), (0, H_pad - H)))
    b2p = _maybe_pad(b2.reshape(1, H), ((0, 0), (0, H_pad - H)))
    gp = _maybe_pad(gamma.reshape(1, H), ((0, 0), (0, H_pad - H)))
    bp = _maybe_pad(beta.reshape(1, H), ((0, 0), (0, H_pad - H)))

    if single:
        grid = (n_rows,)
        in_specs = [
            pl.BlockSpec((tm, H_pad), lambda i: (i, 0)),     # x rows (residual)
            pl.BlockSpec((H_pad, ti), lambda i: (0, 0)),     # w1 (whole, fetched once)
            pl.BlockSpec((1, ti),     lambda i: (0, 0)),     # b1
            pl.BlockSpec((ti, H_pad), lambda i: (0, 0)),     # w2
            pl.BlockSpec((1, H_pad),  lambda i: (0, 0)),     # b2
            pl.BlockSpec((1, H_pad),  lambda i: (0, 0)),     # gamma
            pl.BlockSpec((1, H_pad),  lambda i: (0, 0)),     # beta
        ]
        out_specs = pl.BlockSpec((tm, H_pad), lambda i: (i, 0))
        scratch_shapes = []
        dim_sem = ("parallel",)
        kernel = _make_ffn_kernel_single(eps, H, H_pad)
    else:
        grid = (n_rows, n_ti)
        in_specs = [
            pl.BlockSpec((tm, H_pad), lambda i, k: (i, 0)),  # x rows (residual)
            pl.BlockSpec((H_pad, ti), lambda i, k: (0, k)),  # w1 I-slice
            pl.BlockSpec((1, ti),     lambda i, k: (0, k)),  # b1 I-slice
            pl.BlockSpec((ti, H_pad), lambda i, k: (k, 0)),  # w2 I-slice
            # constant index_maps -> fetched once; tiny footprint
            pl.BlockSpec((1, H_pad),  lambda i, k: (0, 0)),  # b2
            pl.BlockSpec((1, H_pad),  lambda i, k: (0, 0)),  # gamma
            pl.BlockSpec((1, H_pad),  lambda i, k: (0, 0)),  # beta
        ]
        out_specs = pl.BlockSpec((tm, H_pad), lambda i, k: (i, 0))
        scratch_shapes = [pltpu.VMEM((tm, H_pad), jnp.float32)]
        dim_sem = ("parallel", "arbitrary")
        kernel = _make_ffn_kernel_acc(eps, H, H_pad)

    grid_spec = pltpu.PrefetchScalarGridSpec(
        num_scalar_prefetch=0,
        grid=grid,
        in_specs=in_specs,
        out_specs=out_specs,
        scratch_shapes=scratch_shapes,
    )

    # explicit VMEM limit (safe on v5e 16 MiB scoped default and v7x 64 MiB phys)
    vmem_used = (4 * tm * H_pad * x_items                      # x + out, 2-deep
                 + (0 if single else tm * H_pad * 4)           # f32 accumulator
                 + 2 * (H_pad * ti + ti * H_pad) * w_items     # w1/w2, 2-deep
                 + 2 * tm * ti * 4                             # h intermediate
                 + 2 * (ti + 3 * H_pad) * 4)                   # biases / gamma / beta
    vmem_limit = int(min(max(2 * vmem_used, 16 << 20), 48 << 20))

    cost = pl.CostEstimate(
        flops=4 * M_pad * H_pad * I_pad,                       # two matmuls
        transcendentals=M_pad * I_pad,                         # erf
        bytes_accessed=(2 * M_pad * H_pad * x_items
                        + 2 * H_pad * I_pad * w_items
                        + (I_pad + 3 * H_pad) * 4),
    )

    out = pl.pallas_call(
        kernel,
        out_shape=jax.ShapeDtypeStruct((M_pad, H_pad), x.dtype),
        grid_spec=grid_spec,
        compiler_params=pltpu.CompilerParams(
            dimension_semantics=dim_sem,
            vmem_limit_bytes=vmem_limit,
        ),
        cost_estimate=cost,
    )(x2, w1p, b1p, w2p, b2p, gp, bp)

    return out[:M, :H].reshape(B, S, H)


def _reference(x, w1, b1, w2, b2, gamma, beta, eps):
    xf = x.astype(jnp.float32)
    h = xf @ w1.astype(jnp.float32) + b1
    h = h * 0.5 * (1.0 + lax.erf(h / jnp.float32(math.sqrt(2.0))))
    y = h @ w2.astype(jnp.float32) + b2
    z = y + xf
    mean = jnp.mean(z, axis=-1, keepdims=True)
    var = jnp.mean((z - mean) ** 2, axis=-1, keepdims=True)
    return ((z - mean) * lax.rsqrt(var + eps)) * gamma + beta


if __name__ == "__main__":
    B, S, H, I = 2, 8, 32, 64
    eps = 1e-12

    key = jax.random.PRNGKey(0)
    kx, k1, kb1, k2, kb2 = jax.random.split(key, 5)

    x = jax.random.normal(kx, (B, S, H), dtype=jnp.float32)

    # Deterministic parameter init (nn.Linear-style uniform bounds).
    lim1 = 1.0 / math.sqrt(H)
    lim2 = 1.0 / math.sqrt(I)
    w1 = jax.random.uniform(k1, (H, I), jnp.float32, -lim1, lim1)
    b1 = jax.random.uniform(kb1, (I,), jnp.float32, -lim1, lim1)
    w2 = jax.random.uniform(k2, (I, H), jnp.float32, -lim2, lim2)
    b2 = jax.random.uniform(kb2, (H,), jnp.float32, -lim2, lim2)
    gamma = jnp.ones((H,), jnp.float32)   # LayerNorm weight init
    beta = jnp.zeros((H,), jnp.float32)   # LayerNorm bias init

    out = feed_forward(x, w1, b1, w2, b2, gamma, beta, eps=eps)
    out = jax.block_until_ready(out)

    ref = _reference(x, w1, b1, w2, b2, gamma, beta, eps)
    assert out.shape == (B, S, H)
    assert jnp.allclose(out, ref, atol=1e-5, rtol=1e-5), "mismatch vs reference"
    print("KERNEL_OK")
</pallas_src>

<mosaic_0001>
module attributes {stable_mosaic.version = 11 : i64} {
  func.func @ffn_kernel(%arg0: i32, %arg1: memref<8x128xf32, #tpu.memory_space<vmem>>, %arg2: memref<128x128xf32, #tpu.memory_space<vmem>>, %arg3: memref<1x128xf32, #tpu.memory_space<vmem>>, %arg4: memref<128x128xf32, #tpu.memory_space<vmem>>, %arg5: memref<1x128xf32, #tpu.memory_space<vmem>>, %arg6: memref<1x128xf32, #tpu.memory_space<vmem>>, %arg7: memref<1x128xf32, #tpu.memory_space<vmem>>, %arg8: memref<8x128xf32, #tpu.memory_space<vmem>>) attributes {dimension_semantics = [#tpu.dimension_semantics<parallel>], iteration_bounds = array<i64: 2>, scalar_prefetch = 0 : i64, scratch_operands = 0 : i64, tpu.core_type = #tpu.core_type<tc>, window_params = [{transform_indices = @transform_0, window_bounds = array<i64: 8, 128>}, {pipeline_mode = #tpu.pipeline_mode<synchronous>, transform_indices = @transform_1, window_bounds = array<i64: 128, 128>}, {pipeline_mode = #tpu.pipeline_mode<synchronous>, transform_indices = @transform_2, window_bounds = array<i64: 1, 128>}, {pipeline_mode = #tpu.pipeline_mode<synchronous>, transform_indices = @transform_3, window_bounds = array<i64: 128, 128>}, {pipeline_mode = #tpu.pipeline_mode<synchronous>, transform_indices = @transform_4, window_bounds = array<i64: 1, 128>}, {pipeline_mode = #tpu.pipeline_mode<synchronous>, transform_indices = @transform_5, window_bounds = array<i64: 1, 128>}, {pipeline_mode = #tpu.pipeline_mode<synchronous>, transform_indices = @transform_6, window_bounds = array<i64: 1, 128>}, {transform_indices = @transform_7, window_bounds = array<i64: 8, 128>}]} {
    %c0 = arith.constant 0 : index
    %c0_0 = arith.constant 0 : index
    %0 = vector.load %arg1[%c0, %c0_0] : memref<8x128xf32, #tpu.memory_space<vmem>>, vector<8x128xf32>
    %c0_1 = arith.constant 0 : index
    %c0_2 = arith.constant 0 : index
    %1 = vector.load %arg2[%c0_1, %c0_2] : memref<128x128xf32, #tpu.memory_space<vmem>>, vector<128x128xf32>
    %cst = arith.constant dense<0.000000e+00> : vector<8x128xf32>
    %2 = tpu.matmul %0, %1, %cst {dimension_numbers = #tpu.dot_dimension_numbers<[1], [0], [0], [1], [0, 0, 1, 1], [], []>} : vector<8x128xf32>, vector<128x128xf32>, vector<8x128xf32> -> vector<8x128xf32>
    %c0_3 = arith.constant 0 : index
    %c0_4 = arith.constant 0 : index
    %3 = vector.load %arg3[%c0_3, %c0_4] : memref<1x128xf32, #tpu.memory_space<vmem>>, vector<1x128xf32>
    %4 = vector.broadcast %3 : vector<1x128xf32> to vector<8x128xf32>
    %5 = arith.addf %2, %4 : vector<8x128xf32>
    %cst_5 = arith.constant 5.000000e-01 : f32
    %6 = vector.broadcast %cst_5 : f32 to vector<8x128xf32>
    %7 = arith.mulf %5, %6 : vector<8x128xf32>
    %cst_6 = arith.constant 0.707106769 : f32
    %8 = vector.broadcast %cst_6 : f32 to vector<8x128xf32>
    %9 = arith.mulf %5, %8 : vector<8x128xf32>
    %10 = math.erf %9 : vector<8x128xf32>
    %cst_7 = arith.constant 1.000000e+00 : f32
    %11 = vector.broadcast %cst_7 : f32 to vector<8x128xf32>
    %12 = arith.addf %11, %10 : vector<8x128xf32>
    %13 = arith.mulf %7, %12 : vector<8x128xf32>
    %c0_8 = arith.constant 0 : index
    %c0_9 = arith.constant 0 : index
    %14 = vector.load %arg4[%c0_8, %c0_9] : memref<128x128xf32, #tpu.memory_space<vmem>>, vector<128x128xf32>
    %cst_10 = arith.constant dense<0.000000e+00> : vector<8x128xf32>
    %15 = tpu.matmul %13, %14, %cst_10 {dimension_numbers = #tpu.dot_dimension_numbers<[1], [0], [0], [1], [0, 0, 1, 1], [], []>} : vector<8x128xf32>, vector<128x128xf32>, vector<8x128xf32> -> vector<8x128xf32>
    %c0_11 = arith.constant 0 : index
    %c0_12 = arith.constant 0 : index
    %16 = vector.load %arg5[%c0_11, %c0_12] : memref<1x128xf32, #tpu.memory_space<vmem>>, vector<1x128xf32>
    %17 = vector.broadcast %16 : vector<1x128xf32> to vector<8x128xf32>
    %18 = arith.addf %15, %17 : vector<8x128xf32>
    %19 = arith.addf %18, %0 : vector<8x128xf32>
    %cst_13 = arith.constant dense<0.000000e+00> : vector<8xf32>
    %20 = vector.multi_reduction <add>, %19, %cst_13 [1] : vector<8x128xf32> to vector<8xf32>
    %21 = vector.shape_cast %20 : vector<8xf32> to vector<8x1xf32>
    %cst_14 = arith.constant 3.125000e-02 : f32
    %22 = vector.broadcast %cst_14 : f32 to vector<8x1xf32>
    %23 = arith.mulf %21, %22 : vector<8x1xf32>
    %24 = vector.broadcast %23 : vector<8x1xf32> to vector<8x128xf32>
    %25 = arith.subf %19, %24 : vector<8x128xf32>
    %26 = tpu.iota {dimensions = array<i32: 1>} : vector<8x128xi32>
    %c32_i32 = arith.constant 32 : i32
    %27 = vector.broadcast %c32_i32 : i32 to vector<8x128xi32>
    %28 = arith.cmpi slt, %26, %27 : vector<8x128xi32>
    %cst_15 = arith.constant 0.000000e+00 : f32
    %29 = vector.broadcast %cst_15 : f32 to vector<8x128xf32>
    %30 = arith.select %28, %25, %29 : vector<8x128xi1>, vector<8x128xf32>
    %31 = arith.mulf %30, %30 : vector<8x128xf32>
    %cst_16 = arith.constant dense<0.000000e+00> : vector<8xf32>
    %32 = vector.multi_reduction <add>, %31, %cst_16 [1] : vector<8x128xf32> to vector<8xf32>
    %33 = vector.shape_cast %32 : vector<8xf32> to vector<8x1xf32>
    %cst_17 = arith.constant 3.125000e-02 : f32
    %34 = vector.broadcast %cst_17 : f32 to vector<8x1xf32>
    %35 = arith.mulf %33, %34 : vector<8x1xf32>
    %cst_18 = arith.constant 9.99999996E-13 : f32
    %36 = vector.broadcast %cst_18 : f32 to vector<8x1xf32>
    %37 = arith.addf %35, %36 : vector<8x1xf32>
    %38 = math.rsqrt %37 : vector<8x1xf32>
    %39 = vector.broadcast %38 : vector<8x1xf32> to vector<8x128xf32>
    %40 = arith.mulf %25, %39 : vector<8x128xf32>
    %c0_19 = arith.constant 0 : index
    %c0_20 = arith.constant 0 : index
    %41 = vector.load %arg6[%c0_19, %c0_20] : memref<1x128xf32, #tpu.memory_space<vmem>>, vector<1x128xf32>
    %42 = vector.broadcast %41 : vector<1x128xf32> to vector<8x128xf32>
    %43 = arith.mulf %40, %42 : vector<8x128xf32>
    %c0_21 = arith.constant 0 : index
    %c0_22 = arith.constant 0 : index
    %44 = vector.load %arg7[%c0_21, %c0_22] : memref<1x128xf32, #tpu.memory_space<vmem>>, vector<1x128xf32>
    %45 = vector.broadcast %44 : vector<1x128xf32> to vector<8x128xf32>
    %46 = arith.addf %43, %45 : vector<8x128xf32>
    %c0_23 = arith.constant 0 : index
    %c0_24 = arith.constant 0 : index
    %47 = vector.load %arg8[%c0_23, %c0_24] : memref<8x128xf32, #tpu.memory_space<vmem>>, vector<8x128xf32>
    tpu.vector_store %arg8[%c0_23, %c0_24], %46 {strides = array<i32>} : memref<8x128xf32, #tpu.memory_space<vmem>>, vector<8x128xf32>,
    return
  }
  func.func @transform_0(%arg0: i32) -> (i32, i32) {
    %c0_i32 = arith.constant 0 : i32
    %c0_i32_0 = arith.constant 0 : i32
    return %arg0, %c0_i32 : i32, i32
  }
  func.func @transform_1(%arg0: i32) -> (i32, i32) {
    %c0_i32 = arith.constant 0 : i32
    %c0_i32_0 = arith.constant 0 : i32
    %c0_i32_1 = arith.constant 0 : i32
    return %c0_i32, %c0_i32_0 : i32, i32
  }
  func.func @transform_2(%arg0: i32) -> (i32, i32) {
    %c0_i32 = arith.constant 0 : i32
    %c0_i32_0 = arith.constant 0 : i32
    %c0_i32_1 = arith.constant 0 : i32
    return %c0_i32, %c0_i32_0 : i32, i32
  }
  func.func @transform_3(%arg0: i32) -> (i32, i32) {
    %c0_i32 = arith.constant 0 : i32
    %c0_i32_0 = arith.constant 0 : i32
    %c0_i32_1 = arith.constant 0 : i32
    return %c0_i32, %c0_i32_0 : i32, i32
  }
  func.func @transform_4(%arg0: i32) -> (i32, i32) {
    %c0_i32 = arith.constant 0 : i32
    %c0_i32_0 = arith.constant 0 : i32
    %c0_i32_1 = arith.constant 0 : i32
    return %c0_i32, %c0_i32_0 : i32, i32
  }
  func.func @transform_5(%arg0: i32) -> (i32, i32) {
    %c0_i32 = arith.constant 0 : i32
    %c0_i32_0 = arith.constant 0 : i32
    %c0_i32_1 = arith.constant 0 : i32
    return %c0_i32, %c0_i32_0 : i32, i32
  }
  func.func @transform_6(%arg0: i32) -> (i32, i32) {
    %c0_i32 = arith.constant 0 : i32
    %c0_i32_0 = arith.constant 0 : i32
    %c0_i32_1 = arith.constant 0 : i32
    return %c0_i32, %c0_i32_0 : i32, i32
  }
  func.func @transform_7(%arg0: i32) -> (i32, i32) {
    %c0_i32 = arith.constant 0 : i32
    %c0_i32_0 = arith.constant 0 : i32
    return %arg0, %c0_i32 : i32, i32
  }
}

</mosaic_0001>

<llo_original>
// kernel: tpu_custom_call.1
$region0: #{tpu_custom_call.1}
  #allocation0 [shape = 'u32[]', space=smem, size = 0x4, offset = 0x4, fixed_abs, tag = 'smem constant byte address 0x4 - core index']
  #allocation1 [shape = 'u32[144,128]{1,0:T(1,128)}', space=vmem, size = 0x12000, scoped, tag = 'internal scratch']
  %s0 = inlined_call_operand.hbm [shape: f32[16,128], index: 0, kind: input, shape index: {}]
  %s1 = inlined_call_operand.hbm [shape: f32[128,128], index: 1, kind: input, shape index: {}]
  %s2 = inlined_call_operand.vmem [shape: f32[1,128], index: 2, kind: input, shape index: {}]
  %s3 = inlined_call_operand.hbm [shape: f32[128,128], index: 3, kind: input, shape index: {}]
  %s4 = inlined_call_operand.vmem [shape: f32[1,128], index: 4, kind: input, shape index: {}]
  %s5 = inlined_call_operand.vmem [shape: f32[1,128], index: 5, kind: input, shape index: {}]
  %s6 = inlined_call_operand.vmem [shape: f32[1,128], index: 6, kind: input, shape index: {}]
  %s7 = inlined_call_operand.hbm [shape: f32[16,128], index: 7, kind: output, shape index: {}]
  %s8 = sld [smem:[#allocation0]]
  $region73: #{tpu_custom_call.1} parent=0
    _
  %s10 = ssub.s32 1, %s8
  %s11 = scalar_select 0, %s10, %s8
  $region1: #{tpu_custom_call.1} parent=0
    #allocation2 [shape = 'u8[8192]{0}', space=vmem, size = 0x2000, scoped, tag = 'input window, operand 0']
    #allocation3 [shape = 's32[2]{0}', space=sflag, size = 0x8, scoped, tag = 'scoped memory for tpu_custom_call.1']
    #allocation4 [shape = 's32[2]{0}', space=sflag, size = 0x8, scoped, tag = 'scoped memory for tpu_custom_call.1']
    #allocation5 [shape = 'u8[65536]{0}', space=vmem, size = 0x10000, scoped, tag = 'input window, operand 1, single buffered']
    #allocation6 [shape = 's32[1]{0}', space=sflag, size = 0x4, scoped, tag = 'scoped memory for tpu_custom_call.1']
    #allocation7 [shape = 'u8[65536]{0}', space=vmem, size = 0x10000, scoped, tag = 'input window, operand 3, single buffered']
    #allocation8 [shape = 'u8[8192]{0}', space=vmem, size = 0x2000, scoped, tag = 'output window, operand 0']
    %12 = vsyncpa [#allocation3], 0
    %s13 = scalar_lea.sflag [#allocation3], 1
    %14 = vsyncpa %s13, 0
    %15 = vsyncpa [#allocation6], 0
    %16 = vsyncpa [#allocation4], 0
    %s17 = scalar_lea.sflag [#allocation4], 1
    %18 = vsyncpa %s17, 0
    loop: start=0, step=1, limit=4
    $region2: #{tpu_custom_call.1} parent=1 // loop_pre_header
      _
    $region3: #{tpu_custom_call.1} parent=1 // loop_header
      %s20 = sphi 0, %s24
      %p21 = scmp.ge.s32.totalorder %s20, 4
      %s30 = sphi 0, %s32
      %s33 = sphi 0, %s30
      %s34 = sphi 0, %s33
      %s50 = sphi 0, %s34
      %s54 = sphi 0, %s54
      %s56 = sphi 0, %s54
      %s57 = sphi 0, %s56
      %s71 = sphi 0, %s57
      %s75 = sphi 0, %s75
      %s77 = sphi 0, %s75
      %s78 = sphi 0, %s77
      %s92 = sphi 0, %s78
      %s96 = sphi 0, %s96
      %s98 = sphi 0, %s96
      %s99 = sphi 0, %s98
      %s113 = sphi 0, %s99
      %s117 = sphi 0, %s117
      %s119 = sphi 0, %s117
      %s120 = sphi 0, %s119
      %s134 = sphi 0, %s120
      %s138 = sphi 0, %s138
      %s140 = sphi 0, %s138
      %s141 = sphi 0, %s140
      %s155 = sphi 0, %s141
      %s159 = sphi 0, %s159
      %s161 = sphi 0, %s159
      %s162 = sphi 0, %s161
      %s176 = sphi 0, %s162
      %s182 = sphi 0, %s184
      %s185 = sphi 0, %s182
      %s186 = sphi 0, %s185
      %s202 = sphi 0, %s186
    $region4: #{tpu_custom_call.1} parent=1 // loop_header_branch
      %23 = sbr.rel (%p21) target = $region8
    $region5: #{tpu_custom_call.1} parent=1 // loop_body
      %s25 = ssub.s32 %s20, 1
      %s26 = ssub.s32 %s20, 2
      %s27 = sadd.s32 %s20, 1
      %s28 = ssub.s32 %s20, %s27
      %p29 = scmp.eq.s32.totalorder %s28, 0
      %s31 = sadd.s32 %s30, 1
      %s32 = scalar_select %p29, %s30, %s31
      %p35 = pneg %p29
      %p36 = scmp.eq.s32.totalorder %s20, 1
      %p37 = por %p35, %p36
      %p38 = scmp.ne.s32.totalorder %s30, %s33
      %p39 = scmp.eq.s32.totalorder %s20, 0
      %p40 = por %p38, %p39
      %p41 = scmp.ne.s32.totalorder %s30, %s33
      %p42 = scmp.eq.s32.totalorder %s25, 1
      %p43 = por %p41, %p42
      %p44 = scmp.ne.s32.totalorder %s33, %s34
      %p45 = scmp.eq.s32.totalorder %s25, 0
      %p46 = por %p44, %p45
      %p47 = scmp.ne.s32.totalorder %s33, %s34
      %p48 = scmp.eq.s32.totalorder %s26, 1
      %p49 = por %p47, %p48
      %p51 = scmp.ne.s32.totalorder %s34, %s50
      %p52 = scmp.eq.s32.totalorder %s26, 0
      %p53 = por %p51, %p52
      %s55 = sadd.s32 %s54, 1
      %p58 = scmp.eq.s32.totalorder %s20, 1
      %p59 = scmp.ne.s32.totalorder %s54, %s56
      %p60 = scmp.eq.s32.totalorder %s20, 0
      %p61 = por %p59, %p60
      %p62 = scmp.ne.s32.totalorder %s54, %s56
      %p63 = scmp.eq.s32.totalorder %s25, 1
      %p64 = por %p62, %p63
      %p65 = scmp.ne.s32.totalorder %s56, %s57
      %p66 = scmp.eq.s32.totalorder %s25, 0
      %p67 = por %p65, %p66
      %p68 = scmp.ne.s32.totalorder %s56, %s57
      %p69 = scmp.eq.s32.totalorder %s26, 1
      %p70 = por %p68, %p69
      %p72 = scmp.ne.s32.totalorder %s57, %s71
      %p73 = scmp.eq.s32.totalorder %s26, 0
      %p74 = por %p72, %p73
      %s76 = sadd.s32 %s75, 1
      %p79 = scmp.eq.s32.totalorder %s20, 1
      %p80 = scmp.ne.s32.totalorder %s75, %s77
      %p81 = scmp.eq.s32.totalorder %s20, 0
      %p82 = por %p80, %p81
      %p83 = scmp.ne.s32.totalorder %s75, %s77
      %p84 = scmp.eq.s32.totalorder %s25, 1
      %p85 = por %p83, %p84
      %p86 = scmp.ne.s32.totalorder %s77, %s78
      %p87 = scmp.eq.s32.totalorder %s25, 0
      %p88 = por %p86, %p87
      %p89 = scmp.ne.s32.totalorder %s77, %s78
      %p90 = scmp.eq.s32.totalorder %s26, 1
      %p91 = por %p89, %p90
      %p93 = scmp.ne.s32.totalorder %s78, %s92
      %p94 = scmp.eq.s32.totalorder %s26, 0
      %p95 = por %p93, %p94
      %s97 = sadd.s32 %s96, 1
      %p100 = scmp.eq.s32.totalorder %s20, 1
      %p101 = scmp.ne.s32.totalorder %s96, %s98
      %p102 = scmp.eq.s32.totalorder %s20, 0
      %p103 = por %p101, %p102
      %p104 = scmp.ne.s32.totalorder %s96, %s98
      %p105 = scmp.eq.s32.totalorder %s25, 1
      %p106 = por %p104, %p105
      %p107 = scmp.ne.s32.totalorder %s98, %s99
      %p108 = scmp.eq.s32.totalorder %s25, 0
      %p109 = por %p107, %p108
      %p110 = scmp.ne.s32.totalorder %s98, %s99
      %p111 = scmp.eq.s32.totalorder %s26, 1
      %p112 = por %p110, %p111
      %p114 = scmp.ne.s32.totalorder %s99, %s113
      %p115 = scmp.eq.s32.totalorder %s26, 0
      %p116 = por %p114, %p115
      %s118 = sadd.s32 %s117, 1
      %p121 = scmp.eq.s32.totalorder %s20, 1
      %p122 = scmp.ne.s32.totalorder %s117, %s119
      %p123 = scmp.eq.s32.totalorder %s20, 0
      %p124 = por %p122, %p123
      %p125 = scmp.ne.s32.totalorder %s117, %s119
      %p126 = scmp.eq.s32.totalorder %s25, 1
      %p127 = por %p125, %p126
      %p128 = scmp.ne.s32.totalorder %s119, %s120
      %p129 = scmp.eq.s32.totalorder %s25, 0
      %p130 = por %p128, %p129
      %p131 = scmp.ne.s32.totalorder %s119, %s120
      %p132 = scmp.eq.s32.totalorder %s26, 1
      %p133 = por %p131, %p132
      %p135 = scmp.ne.s32.totalorder %s120, %s134
      %p136 = scmp.eq.s32.totalorder %s26, 0
      %p137 = por %p135, %p136
      %s139 = sadd.s32 %s138, 1
      %p142 = scmp.eq.s32.totalorder %s20, 1
      %p143 = scmp.ne.s32.totalorder %s138, %s140
      %p144 = scmp.eq.s32.totalorder %s20, 0
      %p145 = por %p143, %p144
      %p146 = scmp.ne.s32.totalorder %s138, %s140
      %p147 = scmp.eq.s32.totalorder %s25, 1
      %p148 = por %p146, %p147
      %p149 = scmp.ne.s32.totalorder %s140, %s141
      %p150 = scmp.eq.s32.totalorder %s25, 0
      %p151 = por %p149, %p150
      %p152 = scmp.ne.s32.totalorder %s140, %s141
      %p153 = scmp.eq.s32.totalorder %s26, 1
      %p154 = por %p152, %p153
      %p156 = scmp.ne.s32.totalorder %s141, %s155
      %p157 = scmp.eq.s32.totalorder %s26, 0
      %p158 = por %p156, %p157
      %s160 = sadd.s32 %s159, 1
      %p163 = scmp.eq.s32.totalorder %s20, 1
      %p164 = scmp.ne.s32.totalorder %s159, %s161
      %p165 = scmp.eq.s32.totalorder %s20, 0
      %p166 = por %p164, %p165
      %p167 = scmp.ne.s32.totalorder %s159, %s161
      %p168 = scmp.eq.s32.totalorder %s25, 1
      %p169 = por %p167, %p168
      %p170 = scmp.ne.s32.totalorder %s161, %s162
      %p171 = scmp.eq.s32.totalorder %s25, 0
      %p172 = por %p170, %p171
      %p173 = scmp.ne.s32.totalorder %s161, %s162
      %p174 = scmp.eq.s32.totalorder %s26, 1
      %p175 = por %p173, %p174
      %p177 = scmp.ne.s32.totalorder %s162, %s176
      %p178 = scmp.eq.s32.totalorder %s26, 0
      %p179 = por %p177, %p178
      %s180 = ssub.s32 %s20, %s27
      %p181 = scmp.eq.s32.totalorder %s180, 0
      %s183 = sadd.s32 %s182, 1
      %s184 = scalar_select %p181, %s182, %s183
      %p187 = pneg %p181
      %p188 = scmp.eq.s32.totalorder %s20, 1
      %p189 = por %p187, %p188
      %p190 = scmp.ne.s32.totalorder %s182, %s185
      %p191 = scmp.eq.s32.totalorder %s20, 0
      %p192 = por %p190, %p191
      %p193 = scmp.ne.s32.totalorder %s182, %s185
      %p194 = scmp.eq.s32.totalorder %s25, 1
      %p195 = por %p193, %p194
      %p196 = scmp.ne.s32.totalorder %s185, %s186
      %p197 = scmp.eq.s32.totalorder %s25, 0
      %p198 = por %p196, %p197
      %p199 = scmp.ne.s32.totalorder %s185, %s186
      %p200 = scmp.eq.s32.totalorder %s26, 1
      %p201 = por %p199, %p200
      %p203 = scmp.ne.s32.totalorder %s186, %s202
      %p204 = scmp.eq.s32.totalorder %s26, 0
      %p205 = por %p203, %p204
      %p206 = scmp.le.s32.totalorder 1, %s20
      %p207 = scmp.lt.s32.totalorder %s20, 3
      %p208 = pnand %p206, %p207
      %p209 = pneg %p208
      // Predicated region
      $region9: #{tpu_custom_call.1} parent=5 // pred_check
        _
      $region10: #{tpu_custom_call.1} parent=5 // pred_check_branch
        %211 = sbr.rel (%p208) target = $region12
      $region11: #{tpu_custom_call.1} parent=5 // pred_region
        %s212 = ssub.s32 %s20, 1
        // Predicated region
        $region13: #{tpu_custom_call.1} parent=11 // pred_check
          %p213 = pneg %p67
        $region14: #{tpu_custom_call.1} parent=11 // pred_check_branch
          %215 = sbr.rel (%p213) target = $region16
        $region15: #{tpu_custom_call.1} parent=11 // pred_region
          %s217 = ssub.s32 2048, 2048
          %218 = vsyncadd [#allocation6], %s217
          %s219 = sshll.u32 [#allocation5], 4
          %s220 = int_to_ptr.vmem [resolvable:$true] %s219
          %225 = dma.hbm_to_vmem [thread:$0]  %s1, 2048, %s220, [#allocation6], 128, 128, 8
        $region16: #{tpu_custom_call.1} parent=11 // pred_fallthru
          _
        // Predicated region
        $region17: #{tpu_custom_call.1} parent=11 // pred_check
          %p226 = pneg %p88
        $region18: #{tpu_custom_call.1} parent=11 // pred_check_branch
          %228 = sbr.rel (%p226) target = $region20
        $region19: #{tpu_custom_call.1} parent=11 // pred_region
          _
        $region20: #{tpu_custom_call.1} parent=11 // pred_fallthru
          _
        // Predicated region
        $region21: #{tpu_custom_call.1} parent=11 // pred_check
          %p229 = pneg %p109
        $region22: #{tpu_custom_call.1} parent=11 // pred_check_branch
          %231 = sbr.rel (%p229) target = $region24
        $region23: #{tpu_custom_call.1} parent=11 // pred_region
          %s233 = ssub.s32 2048, 2048
          %234 = vsyncadd [#allocation6], %s233
          %s235 = sshll.u32 [#allocation7], 4
          %s236 = int_to_ptr.vmem [resolvable:$true] %s235
          %241 = dma.hbm_to_vmem [thread:$0]  %s3, 2048, %s236, [#allocation6], 128, 128, 8
        $region24: #{tpu_custom_call.1} parent=11 // pred_fallthru
          _
        // Predicated region
        $region25: #{tpu_custom_call.1} parent=11 // pred_check
          %p242 = pneg %p130
        $region26: #{tpu_custom_call.1} parent=11 // pred_check_branch
          %244 = sbr.rel (%p242) target = $region28
        $region27: #{tpu_custom_call.1} parent=11 // pred_region
          _
        $region28: #{tpu_custom_call.1} parent=11 // pred_fallthru
          _
        // Predicated region
        $region29: #{tpu_custom_call.1} parent=11 // pred_check
          %p245 = pneg %p151
        $region30: #{tpu_custom_call.1} parent=11 // pred_check_branch
          %247 = sbr.rel (%p245) target = $region32
        $region31: #{tpu_custom_call.1} parent=11 // pred_region
          _
        $region32: #{tpu_custom_call.1} parent=11 // pred_fallthru
          _
        // Predicated region
        $region33: #{tpu_custom_call.1} parent=11 // pred_check
          %p248 = pneg %p172
        $region34: #{tpu_custom_call.1} parent=11 // pred_check_branch
          %250 = sbr.rel (%p248) target = $region36
        $region35: #{tpu_custom_call.1} parent=11 // pred_region
          _
        $region36: #{tpu_custom_call.1} parent=11 // pred_fallthru
          _
      $region12: #{tpu_custom_call.1} parent=5 // pred_fallthru
        _
      %p251 = scmp.lt.s32.totalorder %s20, 2
      // Predicated region
      $region37: #{tpu_custom_call.1} parent=5 // pred_check
        %p252 = pneg %p251
      $region38: #{tpu_custom_call.1} parent=5 // pred_check_branch
        %254 = sbr.rel (%p252) target = $region40
      $region39: #{tpu_custom_call.1} parent=5 // pred_region
        // Predicated region
        $region41: #{tpu_custom_call.1} parent=39 // pred_check
          %p255 = pneg %p40
        $region42: #{tpu_custom_call.1} parent=39 // pred_check_branch
          %257 = sbr.rel (%p255) target = $region44
        $region43: #{tpu_custom_call.1} parent=39 // pred_region
          %s258 = sand.u32 %s30, 1
          %s259 = scalar_lea.sflag [#allocation3], %s258
          %s260 = sand.u32 %s30, 1
          %s261 = smul.addr %s260, 8
          %s262 = scalar_lea.vmem [#allocation2], %s261
          %s264 = ssub.s32 128, 128
          %265 = vsyncadd %s259, %s264
          %s266 = smul.addr %s20, 128
          %s267 = scalar_lea.hbm %s0, %s266
          %s269 = sshll.u32 %s262, 4
          %s270 = int_to_ptr.vmem [resolvable:$true] %s269
          %272 = dma.hbm_to_vmem [thread:$0]  %s267, 128, %s270, %s259
        $region44: #{tpu_custom_call.1} parent=39 // pred_fallthru
          _
      $region40: #{tpu_custom_call.1} parent=5 // pred_fallthru
        _
      %p273 = scmp.le.s32.totalorder 1, %s20
      %p274 = scmp.lt.s32.totalorder %s20, 3
      %p275 = pnand %p273, %p274
      %p276 = pneg %p275
      // Predicated region
      $region45: #{tpu_custom_call.1} parent=5 // pred_check
        _
      $region46: #{tpu_custom_call.1} parent=5 // pred_check_branch
        %278 = sbr.rel (%p275) target = $region48
      $region47: #{tpu_custom_call.1} parent=5 // pred_region
        %s279 = ssub.s32 %s20, 1
        %s280 = sand.u32 %s33, 1
        %s281 = scalar_lea.sflag [#allocation3], %s280
        %s282 = sand.u32 %s33, 1
        %s283 = smul.addr %s282, 8
        %s284 = scalar_lea.vmem [#allocation2], %s283
        // Predicated region
        $region49: #{tpu_custom_call.1} parent=47 // pred_check
          %p285 = pneg %p46
        $region50: #{tpu_custom_call.1} parent=47 // pred_check_branch
          %287 = sbr.rel (%p285) target = $region52
        $region51: #{tpu_custom_call.1} parent=47 // pred_region
          %288 = dma.done %s281, 128
        $region52: #{tpu_custom_call.1} parent=47 // pred_fallthru
          _
        // Predicated region
        $region53: #{tpu_custom_call.1} parent=47 // pred_check
          %p289 = pneg %p67
        $region54: #{tpu_custom_call.1} parent=47 // pred_check_branch
          %291 = sbr.rel (%p289) target = $region56
        $region55: #{tpu_custom_call.1} parent=47 // pred_region
          %292 = dma.done [#allocation6], 2048
        $region56: #{tpu_custom_call.1} parent=47 // pred_fallthru
          _
        // Predicated region
        $region57: #{tpu_custom_call.1} parent=47 // pred_check
          %p293 = pneg %p109
        $region58: #{tpu_custom_call.1} parent=47 // pred_check_branch
          %295 = sbr.rel (%p293) target = $region60
        $region59: #{tpu_custom_call.1} parent=47 // pred_region
          %296 = dma.done [#allocation6], 2048
        $region60: #{tpu_custom_call.1} parent=47 // pred_fallthru
          _
        %s297 = sand.u32 %s33, 1
        %s298 = scalar_lea.sflag [#allocation3], %s297
        %s299 = sand.u32 %s33, 1
        %s300 = smul.addr %s299, 8
        %s301 = scalar_lea.vmem [#allocation2], %s300
        %p302 = pneg %p46
        %p303 = pneg %p43
        %p304 = pneg %p67
        %p305 = pneg %p64
        %p306 = pneg %p88
        %p307 = pneg %p85
        %p308 = pneg %p109
        %p309 = pneg %p106
        %p310 = pneg %p130
        %p311 = pneg %p127
        %p312 = pneg %p151
        %p313 = pneg %p148
        %p314 = pneg %p172
        %p315 = pneg %p169
        %p316 = pneg %p198
        %p317 = pneg %p195
        %s318 = sand.u32 %s185, 1
        %s319 = scalar_lea.sflag [#allocation4], %s318
        %s320 = sand.u32 %s185, 1
        %s321 = smul.addr %s320, 8
        %s322 = scalar_lea.vmem [#allocation8], %s321
        %v323 = vld [vmem:[%s284] sm:$0xff]
        %v324 = vld [vmem:[#allocation5] sm:$0xff]
        %v325 = vld [vmem:[#allocation5 + $0x8] sm:$0xff]
        %v326 = vld [vmem:[#allocation5 + $0x10] sm:$0xff]
        %v327 = vld [vmem:[#allocation5 + $0x18] sm:$0xff]
        %v328 = vld [vmem:[#allocation5 + $0x20] sm:$0xff]
        %v329 = vld [vmem:[#allocation5 + $0x28] sm:$0xff]
        %v330 = vld [vmem:[#allocation5 + $0x30] sm:$0xff]
        %v331 = vld [vmem:[#allocation5 + $0x38] sm:$0xff]
        %v332 = vld [vmem:[#allocation5 + $0x40] sm:$0xff]
        %v333 = vld [vmem:[#allocation5 + $0x48] sm:$0xff]
        %v334 = vld [vmem:[#allocation5 + $0x50] sm:$0xff]
        %v335 = vld [vmem:[#allocation5 + $0x58] sm:$0xff]
        %v336 = vld [vmem:[#allocation5 + $0x60] sm:$0xff]
        %v337 = vld [vmem:[#allocation5 + $0x68] sm:$0xff]
        %v338 = vld [vmem:[#allocation5 + $0x70] sm:$0xff]
        %v339 = vld [vmem:[#allocation5 + $0x78] sm:$0xff]
        %v340 = vld [vmem:[%s2] sm:$0x1]
        %v342 = vlaneseq
        %v343 = vshrl.u32 %v342, 7
        %v344 = vsub.s32 0, %v343
        %v345 = vrot.slane %v340, %v344
        %347 = vmatprep.subr.mxu0 0.0
        %348 = vmatpush1.msra.mxu0 %v339
        %349 = vmatprep.subr.mxu0 0.0
        %350 = vmatpush1.msra.mxu0 %v338
        %351 = vmatprep.subr.mxu0 0.0
        %352 = vmatpush1.msra.mxu0 %v337
        %353 = vmatprep.subr.mxu0 0.0
        %354 = vmatpush1.msra.mxu0 %v336
        %355 = vmatprep.subr.mxu0 0.0
        %356 = vmatpush1.msra.mxu0 %v335
        %357 = vmatprep.subr.mxu0 0.0
        %358 = vmatpush1.msra.mxu0 %v334
        %359 = vmatprep.subr.mxu0 0.0
        %360 = vmatpush1.msra.mxu0 %v333
        %361 = vmatprep.subr.mxu0 0.0
        %362 = vmatpush1.msra.mxu0 %v332
        %363 = vmatprep.subr.mxu0 0.0
        %364 = vmatpush1.msra.mxu0 %v331
        %365 = vmatprep.subr.mxu0 0.0
        %366 = vmatpush1.msra.mxu0 %v330
        %367 = vmatprep.subr.mxu0 0.0
        %368 = vmatpush1.msra.mxu0 %v329
        %369 = vmatprep.subr.mxu0 0.0
        %370 = vmatpush1.msra.mxu0 %v328
        %371 = vmatprep.subr.mxu0 0.0
        %372 = vmatpush1.msra.mxu0 %v327
        %373 = vmatprep.subr.mxu0 0.0
        %374 = vmatpush1.msra.mxu0 %v326
        %375 = vmatprep.subr.mxu0 0.0
        %376 = vmatpush1.msra.mxu0 %v325
        %377 = vmatprep.subr.mxu0 0.0
        %378 = vmatpush1.msra.mxu0 %v324
        %379 = vmatprep.subr.mxu0 0.0
        %380 = vmatpush2.msra.mxu0 0.0
        %381 = vmatprep.subr.mxu0 0.0
        %382 = vmatpush2.msra.mxu0 0.0
        %383 = vmatprep.subr.mxu0 0.0
        %384 = vmatpush2.msra.mxu0 0.0
        %385 = vmatprep.subr.mxu0 0.0
        %386 = vmatpush2.msra.mxu0 0.0
        %387 = vmatprep.subr.mxu0 0.0
        %388 = vmatpush2.msra.mxu0 0.0
        %389 = vmatprep.subr.mxu0 0.0
        %390 = vmatpush2.msra.mxu0 0.0
        %391 = vmatprep.subr.mxu0 0.0
        %392 = vmatpush2.msra.mxu0 0.0
        %393 = vmatprep.subr.mxu0 0.0
        %394 = vmatpush2.msra.mxu0 0.0
        %395 = vmatprep.subr.mxu0 0.0
        %396 = vmatpush2.msra.mxu0 0.0
        %397 = vmatprep.subr.mxu0 0.0
        %398 = vmatpush2.msra.mxu0 0.0
        %399 = vmatprep.subr.mxu0 0.0
        %400 = vmatpush2.msra.mxu0 0.0
        %401 = vmatprep.subr.mxu0 0.0
        %402 = vmatpush2.msra.mxu0 0.0
        %403 = vmatprep.subr.mxu0 0.0
        %404 = vmatpush2.msra.mxu0 0.0
        %405 = vmatprep.subr.mxu0 0.0
        %406 = vmatpush2.msra.mxu0 0.0
        %407 = vmatprep.subr.mxu0 0.0
        %408 = vmatpush2.msra.mxu0 0.0
        %409 = vmatprep.subr.mxu0 0.0
        %410 = vmatpush2.msra.mxu0 0.0
        %411 = vmatprep.mubr.f32.mxu0 0.0
        %412 = vmatmul.mubr.f32.gmra.mxu0 %v323
        %v413 = vpop.f32.mrf.mxu0
        %v414 = vadd.f32 %v345, %v413
        %v415 = vpop.f32.mrf.mxu0
        %416 = vdwg.mxu0
        %v417 = vmul.f32 %v414, 0.5
        %v418 = vmul.f32 %v414, 0.70710677
        %v419 = verf.f32.pop %v418
        %v420 = vadd.f32 %v419, 1.0
        %v421 = vmul.f32 %v417, %v420
        %v422 = vld [vmem:[#allocation7] sm:$0xff]
        %v423 = vld [vmem:[#allocation7 + $0x8] sm:$0xff]
        %v424 = vld [vmem:[#allocation7 + $0x10] sm:$0xff]
        %v425 = vld [vmem:[#allocation7 + $0x18] sm:$0xff]
        %v426 = vld [vmem:[#allocation7 + $0x20] sm:$0xff]
        %v427 = vld [vmem:[#allocation7 + $0x28] sm:$0xff]
        %v428 = vld [vmem:[#allocation7 + $0x30] sm:$0xff]
        %v429 = vld [vmem:[#allocation7 + $0x38] sm:$0xff]
        %v430 = vld [vmem:[#allocation7 + $0x40] sm:$0xff]
        %v431 = vld [vmem:[#allocation7 + $0x48] sm:$0xff]
        %v432 = vld [vmem:[#allocation7 + $0x50] sm:$0xff]
        %v433 = vld [vmem:[#allocation7 + $0x58] sm:$0xff]
        %v434 = vld [vmem:[#allocation7 + $0x60] sm:$0xff]
        %v435 = vld [vmem:[#allocation7 + $0x68] sm:$0xff]
        %v436 = vld [vmem:[#allocation7 + $0x70] sm:$0xff]
        %v437 = vld [vmem:[#allocation7 + $0x78] sm:$0xff]
        %v438 = vld [vmem:[%s4] sm:$0x1]
        %v440 = vlaneseq
        %v441 = vshrl.u32 %v440, 7
        %v442 = vsub.s32 0, %v441
        %v443 = vrot.slane %v438, %v442
        %445 = vmatprep.subr.mxu0 0.0
        %446 = vmatpush1.msra.mxu0 %v437
        %447 = vmatprep.subr.mxu0 0.0
        %448 = vmatpush1.msra.mxu0 %v436
        %449 = vmatprep.subr.mxu0 0.0
        %450 = vmatpush1.msra.mxu0 %v435
        %451 = vmatprep.subr.mxu0 0.0
        %452 = vmatpush1.msra.mxu0 %v434
        %453 = vmatprep.subr.mxu0 0.0
        %454 = vmatpush1.msra.mxu0 %v433
        %455 = vmatprep.subr.mxu0 0.0
        %456 = vmatpush1.msra.mxu0 %v432
        %457 = vmatprep.subr.mxu0 0.0
        %458 = vmatpush1.msra.mxu0 %v431
        %459 = vmatprep.subr.mxu0 0.0
        %460 = vmatpush1.msra.mxu0 %v430
        %461 = vmatprep.subr.mxu0 0.0
        %462 = vmatpush1.msra.mxu0 %v429
        %463 = vmatprep.subr.mxu0 0.0
        %464 = vmatpush1.msra.mxu0 %v428
        %465 = vmatprep.subr.mxu0 0.0
        %466 = vmatpush1.msra.mxu0 %v427
        %467 = vmatprep.subr.mxu0 0.0
        %468 = vmatpush1.msra.mxu0 %v426
        %469 = vmatprep.subr.mxu0 0.0
        %470 = vmatpush1.msra.mxu0 %v425
        %471 = vmatprep.subr.mxu0 0.0
        %472 = vmatpush1.msra.mxu0 %v424
        %473 = vmatprep.subr.mxu0 0.0
        %474 = vmatpush1.msra.mxu0 %v423
        %475 = vmatprep.subr.mxu0 0.0
        %476 = vmatpush1.msra.mxu0 %v422
        %477 = vmatprep.subr.mxu0 0.0
        %478 = vmatpush2.msra.mxu0 0.0
        %479 = vmatprep.subr.mxu0 0.0
        %480 = vmatpush2.msra.mxu0 0.0
        %481 = vmatprep.subr.mxu0 0.0
        %482 = vmatpush2.msra.mxu0 0.0
        %483 = vmatprep.subr.mxu0 0.0
        %484 = vmatpush2.msra.mxu0 0.0
        %485 = vmatprep.subr.mxu0 0.0
        %486 = vmatpush2.msra.mxu0 0.0
        %487 = vmatprep.subr.mxu0 0.0
        %488 = vmatpush2.msra.mxu0 0.0
        %489 = vmatprep.subr.mxu0 0.0
        %490 = vmatpush2.msra.mxu0 0.0
        %491 = vmatprep.subr.mxu0 0.0
        %492 = vmatpush2.msra.mxu0 0.0
        %493 = vmatprep.subr.mxu0 0.0
        %494 = vmatpush2.msra.mxu0 0.0
        %495 = vmatprep.subr.mxu0 0.0
        %496 = vmatpush2.msra.mxu0 0.0
        %497 = vmatprep.subr.mxu0 0.0
        %498 = vmatpush2.msra.mxu0 0.0
        %499 = vmatprep.subr.mxu0 0.0
        %500 = vmatpush2.msra.mxu0 0.0
        %501 = vmatprep.subr.mxu0 0.0
        %502 = vmatpush2.msra.mxu0 0.0
        %503 = vmatprep.subr.mxu0 0.0
        %504 = vmatpush2.msra.mxu0 0.0
        %505 = vmatprep.subr.mxu0 0.0
        %506 = vmatpush2.msra.mxu0 0.0
        %507 = vmatprep.subr.mxu0 0.0
        %508 = vmatpush2.msra.mxu0 0.0
        %509 = vmatprep.mubr.f32.mxu0 0.0
        %510 = vmatmul.mubr.f32.gmra.mxu0 %v421
        %v511 = vpop.f32.mrf.mxu0
        %v512 = vadd.f32 %v443, %v511
        %v513 = vpop.f32.mrf.mxu0
        %514 = vdwg.mxu0
        %v515 = vadd.f32 %v512, %v323
        %516 = vadd.xlane.f32.xlu0 %v515
        %v517 = vpop.xlane.xlu0 %516
        %v518 = vmul.f32 %v517, 0.03125
        %v519 = vsub.f32 %v515, %v518
        %v520 = vlaneseq
        %v521 = vand.u32 %v520, 127
        %vm522 = vcmp.lt.s32.totalorder %v521, 32
        %v523 = vsel %vm522, %v519, 0.0
        %v524 = vmul.f32 %v523, %v523
        %525 = vadd.xlane.f32.xlu0 %v524
        %v526 = vpop.xlane.xlu0 %525
        %v527 = vmul.f32 %v526, 0.03125
        %v528 = vadd.f32 %v527, 1e-12
        %v529 = vrsqrt.pop %v528
        %v530 = vmul.f32 %v519, %v529
        %v531 = vld [vmem:[%s5] sm:$0x1]
        %v533 = vlaneseq
        %v534 = vshrl.u32 %v533, 7
        %v535 = vsub.s32 0, %v534
        %v536 = vrot.slane %v531, %v535
        %v538 = vmul.f32 %v530, %v536
        %v539 = vld [vmem:[%s6] sm:$0x1]
        %v541 = vlaneseq
        %v542 = vshrl.u32 %v541, 7
        %v543 = vsub.s32 0, %v542
        %v544 = vrot.slane %v539, %v543
        %v546 = vadd.f32 %v538, %v544
        %547 = vst [vmem:[%s322] sm:$0xff] %v546
        %s548 = sand.u32 %s185, 1
        %s549 = scalar_lea.sflag [#allocation4], %s548
        %s550 = sand.u32 %s185, 1
        %s551 = smul.addr %s550, 8
        %s552 = scalar_lea.vmem [#allocation8], %s551
        // Predicated region
        $region61: #{tpu_custom_call.1} parent=47 // pred_check
          %p553 = pneg %p195
        $region62: #{tpu_custom_call.1} parent=47 // pred_check_branch
          %555 = sbr.rel (%p553) target = $region64
        $region63: #{tpu_custom_call.1} parent=47 // pred_region
          %s557 = ssub.s32 128, 128
          %558 = vsyncadd %s549, %s557
          %s559 = smul.addr %s25, 128
          %s560 = scalar_lea.hbm %s7, %s559
          %s562 = sshll.u32 %s552, 4
          %s563 = int_to_ptr.vmem [resolvable:$true] %s562
          %565 = dma.vmem_to_hbm [thread:$0]  %s563, 128, %s560, %s549
        $region64: #{tpu_custom_call.1} parent=47 // pred_fallthru
          _
      $region48: #{tpu_custom_call.1} parent=5 // pred_fallthru
        _
      %p566 = scmp.le.s32.totalorder 2, %s20
      // Predicated region
      $region65: #{tpu_custom_call.1} parent=5 // pred_check
        %p567 = pneg %p566
      $region66: #{tpu_custom_call.1} parent=5 // pred_check_branch
        %569 = sbr.rel (%p567) target = $region68
      $region67: #{tpu_custom_call.1} parent=5 // pred_region
        %s570 = ssub.s32 %s20, 2
        // Predicated region
        $region69: #{tpu_custom_call.1} parent=67 // pred_check
          %p571 = pneg %p201
        $region70: #{tpu_custom_call.1} parent=67 // pred_check_branch
          %573 = sbr.rel (%p571) target = $region72
        $region71: #{tpu_custom_call.1} parent=67 // pred_region
          %s574 = sand.u32 %s186, 1
          %s575 = scalar_lea.sflag [#allocation4], %s574
          %s576 = sand.u32 %s186, 1
          %s577 = smul.addr %s576, 8
          %s578 = scalar_lea.vmem [#allocation8], %s577
          %579 = dma.done %s575, 128
        $region72: #{tpu_custom_call.1} parent=67 // pred_fallthru
          _
      $region68: #{tpu_custom_call.1} parent=5 // pred_fallthru
        _
    $region6: #{tpu_custom_call.1} parent=1 // loop_footer
      %s24 = sadd.s32 1, %s20
    $region7: #{tpu_custom_call.1} parent=1 // loop_footer_branch
      %19 = sbr.rel target = $region3
    $region8: #{tpu_custom_call.1} parent=1 // loop_exit
      _
    %580 = vsyncpa [#allocation3], 1
    %s581 = scalar_lea.sflag [#allocation3], 1
    %582 = vsyncpa %s581, 1
    %583 = vsyncpa [#allocation6], 1
    %584 = vsyncpa [#allocation4], 1
    %s585 = scalar_lea.sflag [#allocation4], 1
    %586 = vsyncpa %s585, 1

</llo_original>
